<compile_context>
chip_gen: v7x
topology: tpu7x:2x2x1
jax: 0.10.0
libtpu: 0.0.40
codegen_flags: <defaults>
</compile_context>

<pallas_src>
import math

import jax
import jax.numpy as jnp
from jax.experimental import pallas as pl
from jax.experimental.pallas import tpu as pltpu


# ----------------------------------------------------------------------------- kernel
def attention_fusion_kernel(gat_ref, gvp_ref,
                            a_ref, b_ref, c_ref,      # folded affine map (pre-activation)
                            w2_ref, b2_ref,           # final Linear(H -> H)
                            out_ref):
    # Pre-activation: single affine map of (gat, gvp), BN already folded in.
    y = (jnp.dot(gat_ref[...], a_ref[...], preferred_element_type=jnp.float32)
         + jnp.dot(gvp_ref[...], b_ref[...], preferred_element_type=jnp.float32)
         + c_ref[...])

    # LeakyReLU(0.2)  (Dropout -> identity in eval mode)
    y = jnp.where(y >= 0.0, y, 0.2 * y)

    # Final Linear(H -> H)
    out_ref[...] = (jnp.dot(y, w2_ref[...], preferred_element_type=jnp.float32)
                    + b2_ref[...]).astype(out_ref.dtype)


# ----------------------------------------------------------------------------- folding
def fold_params(p):
    """Fold the two seq-len-1 attentions, the 4H->H Linear and eval-mode BN
    into a single affine map (A, B, c).  Exact up to fp reassociation."""
    # attention #1 acts on gvp, feeds w1c; attention #2 acts on gat, feeds w1d.
    m1 = p["wv1"] @ p["wo1"]                       # [H, H]
    m2 = p["wv2"] @ p["wo2"]                       # [H, H]
    A = p["w1a"] + m2 @ p["w1d"]                   # multiplies gat
    B = p["w1b"] + m1 @ p["w1c"]                   # multiplies gvp
    c = (p["b1"]
         + (p["bv1"] @ p["wo1"] + p["bo1"]) @ p["w1c"]
         + (p["bv2"] @ p["wo2"] + p["bo2"]) @ p["w1d"])      # [1, H]

    # fold BatchNorm1d (eval mode) scale/shift into the affine map
    A = A * p["bn_scale"]                          # broadcast over output channels
    B = B * p["bn_scale"]
    c = c * p["bn_scale"] + p["bn_shift"]

    return dict(A=A, B=B, c=c, w2=p["w2"], b2=p["b2"])


# ----------------------------------------------------------------------------- wrapper
def attention_fusion(gat, gvp, params, *, row_tile=None):
    N, H = gat.shape
    fp = fold_params(params)

    # --- choose a big row tile (mem-bound regime), but keep >=2 grid steps
    #     when possible so v7x's two TensorCores both get work.
    if row_tile is None:
        row_tile = max(8, min(512, ((N + 7) // 8) * 8))
        if N > 8 and row_tile >= N:
            row_tile = max(8, ((pl.cdiv(N, 2) + 7) // 8) * 8)

    # --- pad rows to a multiple of the tile (masked tail handled by padding)
    n_pad = pl.cdiv(N, row_tile) * row_tile
    if n_pad != N:
        gat = jnp.pad(gat, ((0, n_pad - N), (0, 0)))
        gvp = jnp.pad(gvp, ((0, n_pad - N), (0, 0)))

    row_spec = pl.BlockSpec((row_tile, H), lambda i: (i, 0))
    mat_spec = pl.BlockSpec((H, H), lambda i: (0, 0))
    vec_spec = pl.BlockSpec((1, H), lambda i: (0, 0))

    out = pl.pallas_call(
        attention_fusion_kernel,
        out_shape=jax.ShapeDtypeStruct((n_pad, H), jnp.float32),
        grid_spec=pltpu.PrefetchScalarGridSpec(
            num_scalar_prefetch=0,
            grid=(n_pad // row_tile,),
            in_specs=[row_spec, row_spec,
                      mat_spec, mat_spec, vec_spec,
                      mat_spec, vec_spec],
            out_specs=row_spec,
        ),
        compiler_params=pltpu.CompilerParams(
            dimension_semantics=("parallel",),
        ),
    )(gat, gvp, fp["A"], fp["B"], fp["c"], fp["w2"], fp["b2"])

    return out[:N]


# ----------------------------------------------------------------------------- params
def xavier_uniform(key, out_dim, in_dim):
    a = math.sqrt(6.0 / (in_dim + out_dim))
    return jax.random.uniform(key, (out_dim, in_dim), jnp.float32, -a, a)


def init_params(key, hidden_dim):
    H = hidden_dim
    ks = jax.random.split(key, 6)

    # MultiheadAttention #1 (gat -> gvp): only the value slice of in_proj matters
    in_proj1 = xavier_uniform(ks[0], 3 * H, H)          # [3H, H]
    wv1 = in_proj1[2 * H:3 * H, :].T                    # [H, H]  (x @ wv1)
    bv1 = jnp.zeros((1, H), jnp.float32)                # in_proj_bias init = 0
    wo1 = xavier_uniform(ks[1], H, H).T
    bo1 = jnp.zeros((1, H), jnp.float32)                # out_proj bias init = 0

    # MultiheadAttention #2 (gvp -> gat)
    in_proj2 = xavier_uniform(ks[2], 3 * H, H)
    wv2 = in_proj2[2 * H:3 * H, :].T
    bv2 = jnp.zeros((1, H), jnp.float32)
    wo2 = xavier_uniform(ks[3], H, H).T
    bo2 = jnp.zeros((1, H), jnp.float32)

    # linear_stack[0]: Linear(4H -> H), xavier_uniform, zero bias
    w1 = xavier_uniform(ks[4], H, 4 * H)                # [H, 4H]
    w1a = w1[:, 0 * H:1 * H].T                          # applied to gat
    w1b = w1[:, 1 * H:2 * H].T                          # applied to gvp
    w1c = w1[:, 2 * H:3 * H].T                          # applied to attn_gat_to_gvp
    w1d = w1[:, 3 * H:4 * H].T                          # applied to attn_gvp_to_gat
    b1 = jnp.zeros((1, H), jnp.float32)

    # BatchNorm1d(H) eval: gamma=1, beta=0, running_mean=0, running_var=1, eps=1e-5
    eps = 1e-5
    gamma = jnp.ones((H,), jnp.float32)
    beta = jnp.zeros((H,), jnp.float32)
    running_mean = jnp.zeros((H,), jnp.float32)
    running_var = jnp.ones((H,), jnp.float32)
    bn_scale = (gamma / jnp.sqrt(running_var + eps)).reshape(1, H)
    bn_shift = (beta - running_mean * bn_scale[0]).reshape(1, H)

    # linear_stack[4]: Linear(H -> H), xavier_uniform, zero bias
    w2 = xavier_uniform(ks[5], H, H).T
    b2 = jnp.zeros((1, H), jnp.float32)

    return dict(wv1=wv1, bv1=bv1, wo1=wo1, bo1=bo1,
                wv2=wv2, bv2=bv2, wo2=wo2, bo2=bo2,
                w1a=w1a, w1b=w1b, w1c=w1c, w1d=w1d, b1=b1,
                bn_scale=bn_scale, bn_shift=bn_shift,
                w2=w2, b2=b2)


# ----------------------------------------------------------------------------- reference
def reference(gat, gvp, p):
    # Unfused reference following the original module structure (eval mode).
    a1 = (gvp @ p["wv1"] + p["bv1"]) @ p["wo1"] + p["bo1"]
    a2 = (gat @ p["wv2"] + p["bv2"]) @ p["wo2"] + p["bo2"]
    y = (gat @ p["w1a"] + gvp @ p["w1b"] + a1 @ p["w1c"] + a2 @ p["w1d"] + p["b1"])
    y = y * p["bn_scale"] + p["bn_shift"]
    y = jnp.where(y >= 0.0, y, 0.2 * y)
    return y @ p["w2"] + p["b2"]


if __name__ == "__main__":
    N, H = 16, 32  # 16 samples, hidden_dim=32 (num_heads=4 absorbed: seq_len==1)

    key = jax.random.PRNGKey(0)
    k_gat, k_gvp, k_param = jax.random.split(key, 3)
    gat_feat = jax.random.normal(k_gat, (N, H), jnp.float32)
    gvp_feat = jax.random.normal(k_gvp, (N, H), jnp.float32)

    params = init_params(k_param, H)

    out = attention_fusion(gat_feat, gvp_feat, params)
    out = jax.block_until_ready(out)

    ref = reference(gat_feat, gvp_feat, params)
    assert out.shape == (N, H)
    # Weight folding reassociates fp ops -> slightly looser tolerance than 1e-5.
    assert jnp.allclose(out, ref, atol=1e-4, rtol=1e-4), "mismatch vs reference"

    # Also exercise a non-multiple-of-tile row count (padded tail path).
    N2 = 13
    out2 = jax.block_until_ready(
        attention_fusion(gat_feat[:N2], gvp_feat[:N2], params))
    assert out2.shape == (N2, H)
    assert jnp.allclose(out2, ref[:N2], atol=1e-4, rtol=1e-4), "tail mismatch"

    print("KERNEL_OK")
</pallas_src>

<mosaic_0001>
module attributes {stable_mosaic.version = 11 : i64} {
  func.func @attention_fusion_kernel(%arg0: i32, %arg1: memref<8x32xf32, #tpu.memory_space<vmem>>, %arg2: memref<8x32xf32, #tpu.memory_space<vmem>>, %arg3: memref<32x32xf32, #tpu.memory_space<vmem>>, %arg4: memref<32x32xf32, #tpu.memory_space<vmem>>, %arg5: memref<1x32xf32, #tpu.memory_space<vmem>>, %arg6: memref<32x32xf32, #tpu.memory_space<vmem>>, %arg7: memref<1x32xf32, #tpu.memory_space<vmem>>, %arg8: memref<8x32xf32, #tpu.memory_space<vmem>>) attributes {dimension_semantics = [#tpu.dimension_semantics<parallel>], iteration_bounds = array<i64: 2>, scalar_prefetch = 0 : i64, scratch_operands = 0 : i64, tpu.core_type = #tpu.core_type<tc>, window_params = [{transform_indices = @transform_0, window_bounds = array<i64: 8, 32>}, {transform_indices = @transform_1, window_bounds = array<i64: 8, 32>}, {pipeline_mode = #tpu.pipeline_mode<synchronous>, transform_indices = @transform_2, window_bounds = array<i64: 32, 32>}, {pipeline_mode = #tpu.pipeline_mode<synchronous>, transform_indices = @transform_3, window_bounds = array<i64: 32, 32>}, {pipeline_mode = #tpu.pipeline_mode<synchronous>, transform_indices = @transform_4, window_bounds = array<i64: 1, 32>}, {pipeline_mode = #tpu.pipeline_mode<synchronous>, transform_indices = @transform_5, window_bounds = array<i64: 32, 32>}, {pipeline_mode = #tpu.pipeline_mode<synchronous>, transform_indices = @transform_6, window_bounds = array<i64: 1, 32>}, {transform_indices = @transform_7, window_bounds = array<i64: 8, 32>}]} {
    %c0 = arith.constant 0 : index
    %c0_0 = arith.constant 0 : index
    %0 = vector.load %arg1[%c0, %c0_0] : memref<8x32xf32, #tpu.memory_space<vmem>>, vector<8x32xf32>
    %c0_1 = arith.constant 0 : index
    %c0_2 = arith.constant 0 : index
    %1 = vector.load %arg3[%c0_1, %c0_2] : memref<32x32xf32, #tpu.memory_space<vmem>>, vector<32x32xf32>
    %cst = arith.constant dense<0.000000e+00> : vector<8x32xf32>
    %2 = tpu.matmul %0, %1, %cst {dimension_numbers = #tpu.dot_dimension_numbers<[1], [0], [0], [1], [0, 0, 1, 1], [], []>} : vector<8x32xf32>, vector<32x32xf32>, vector<8x32xf32> -> vector<8x32xf32>
    %c0_3 = arith.constant 0 : index
    %c0_4 = arith.constant 0 : index
    %3 = vector.load %arg2[%c0_3, %c0_4] : memref<8x32xf32, #tpu.memory_space<vmem>>, vector<8x32xf32>
    %c0_5 = arith.constant 0 : index
    %c0_6 = arith.constant 0 : index
    %4 = vector.load %arg4[%c0_5, %c0_6] : memref<32x32xf32, #tpu.memory_space<vmem>>, vector<32x32xf32>
    %cst_7 = arith.constant dense<0.000000e+00> : vector<8x32xf32>
    %5 = tpu.matmul %3, %4, %cst_7 {dimension_numbers = #tpu.dot_dimension_numbers<[1], [0], [0], [1], [0, 0, 1, 1], [], []>} : vector<8x32xf32>, vector<32x32xf32>, vector<8x32xf32> -> vector<8x32xf32>
    %6 = arith.addf %2, %5 : vector<8x32xf32>
    %c0_8 = arith.constant 0 : index
    %c0_9 = arith.constant 0 : index
    %7 = vector.load %arg5[%c0_8, %c0_9] : memref<1x32xf32, #tpu.memory_space<vmem>>, vector<1x32xf32>
    %8 = vector.broadcast %7 : vector<1x32xf32> to vector<8x32xf32>
    %9 = arith.addf %6, %8 : vector<8x32xf32>
    %cst_10 = arith.constant 0.000000e+00 : f32
    %10 = vector.broadcast %cst_10 : f32 to vector<8x32xf32>
    %11 = arith.cmpf oge, %9, %10 : vector<8x32xf32>
    %cst_11 = arith.constant 2.000000e-01 : f32
    %12 = vector.broadcast %cst_11 : f32 to vector<8x32xf32>
    %13 = arith.mulf %12, %9 : vector<8x32xf32>
    %14 = arith.select %11, %9, %13 : vector<8x32xi1>, vector<8x32xf32>
    %c0_12 = arith.constant 0 : index
    %c0_13 = arith.constant 0 : index
    %15 = vector.load %arg6[%c0_12, %c0_13] : memref<32x32xf32, #tpu.memory_space<vmem>>, vector<32x32xf32>
    %cst_14 = arith.constant dense<0.000000e+00> : vector<8x32xf32>
    %16 = tpu.matmul %14, %15, %cst_14 {dimension_numbers = #tpu.dot_dimension_numbers<[1], [0], [0], [1], [0, 0, 1, 1], [], []>} : vector<8x32xf32>, vector<32x32xf32>, vector<8x32xf32> -> vector<8x32xf32>
    %c0_15 = arith.constant 0 : index
    %c0_16 = arith.constant 0 : index
    %17 = vector.load %arg7[%c0_15, %c0_16] : memref<1x32xf32, #tpu.memory_space<vmem>>, vector<1x32xf32>
    %18 = vector.broadcast %17 : vector<1x32xf32> to vector<8x32xf32>
    %19 = arith.addf %16, %18 : vector<8x32xf32>
    %c0_17 = arith.constant 0 : index
    %c0_18 = arith.constant 0 : index
    %20 = vector.load %arg8[%c0_17, %c0_18] : memref<8x32xf32, #tpu.memory_space<vmem>>, vector<8x32xf32>
    tpu.vector_store %arg8[%c0_17, %c0_18], %19 {strides = array<i32>} : memref<8x32xf32, #tpu.memory_space<vmem>>, vector<8x32xf32>,
    return
  }
  func.func @transform_0(%arg0: i32) -> (i32, i32) {
    %c0_i32 = arith.constant 0 : i32
    %c0_i32_0 = arith.constant 0 : i32
    return %arg0, %c0_i32 : i32, i32
  }
  func.func @transform_1(%arg0: i32) -> (i32, i32) {
    %c0_i32 = arith.constant 0 : i32
    %c0_i32_0 = arith.constant 0 : i32
    return %arg0, %c0_i32 : i32, i32
  }
  func.func @transform_2(%arg0: i32) -> (i32, i32) {
    %c0_i32 = arith.constant 0 : i32
    %c0_i32_0 = arith.constant 0 : i32
    %c0_i32_1 = arith.constant 0 : i32
    return %c0_i32, %c0_i32_0 : i32, i32
  }
  func.func @transform_3(%arg0: i32) -> (i32, i32) {
    %c0_i32 = arith.constant 0 : i32
    %c0_i32_0 = arith.constant 0 : i32
    %c0_i32_1 = arith.constant 0 : i32
    return %c0_i32, %c0_i32_0 : i32, i32
  }
  func.func @transform_4(%arg0: i32) -> (i32, i32) {
    %c0_i32 = arith.constant 0 : i32
    %c0_i32_0 = arith.constant 0 : i32
    %c0_i32_1 = arith.constant 0 : i32
    return %c0_i32, %c0_i32_0 : i32, i32
  }
  func.func @transform_5(%arg0: i32) -> (i32, i32) {
    %c0_i32 = arith.constant 0 : i32
    %c0_i32_0 = arith.constant 0 : i32
    %c0_i32_1 = arith.constant 0 : i32
    return %c0_i32, %c0_i32_0 : i32, i32
  }
  func.func @transform_6(%arg0: i32) -> (i32, i32) {
    %c0_i32 = arith.constant 0 : i32
    %c0_i32_0 = arith.constant 0 : i32
    %c0_i32_1 = arith.constant 0 : i32
    return %c0_i32, %c0_i32_0 : i32, i32
  }
  func.func @transform_7(%arg0: i32) -> (i32, i32) {
    %c0_i32 = arith.constant 0 : i32
    %c0_i32_0 = arith.constant 0 : i32
    return %arg0, %c0_i32 : i32, i32
  }
}

</mosaic_0001>

<llo_original>
// kernel: tpu_custom_call.1
$region0: #{tpu_custom_call.1}
  #allocation0 [shape = 'u32[]', space=smem, size = 0x4, offset = 0x4, fixed_abs, tag = 'smem constant byte address 0x4 - core index']
  #allocation1 [shape = 'u32[144,128]{1,0:T(1,128)}', space=vmem, size = 0x12000, scoped, tag = 'internal scratch']
  %s0 = inlined_call_operand.hbm [shape: f32[16,32], index: 0, kind: input, shape index: {}]
  %s1 = inlined_call_operand.hbm [shape: f32[16,32], index: 1, kind: input, shape index: {}]
  %s2 = inlined_call_operand.hbm [shape: f32[32,32], index: 2, kind: input, shape index: {}]
  %s3 = inlined_call_operand.hbm [shape: f32[32,32], index: 3, kind: input, shape index: {}]
  %s4 = inlined_call_operand.vmem [shape: f32[1,32], index: 4, kind: input, shape index: {}]
  %s5 = inlined_call_operand.hbm [shape: f32[32,32], index: 5, kind: input, shape index: {}]
  %s6 = inlined_call_operand.vmem [shape: f32[1,32], index: 6, kind: input, shape index: {}]
  %s7 = inlined_call_operand.hbm [shape: f32[16,32], index: 7, kind: output, shape index: {}]
  %s8 = sld [smem:[#allocation0]]
  $region81: #{tpu_custom_call.1} parent=0
    _
  %s10 = ssub.s32 1, %s8
  %s11 = scalar_select 0, %s10, %s8
  $region1: #{tpu_custom_call.1} parent=0
    #allocation2 [shape = 'u8[8192]{0}', space=vmem, size = 0x2000, scoped, tag = 'input window, operand 0']
    #allocation3 [shape = 's32[2]{0}', space=sflag, size = 0x8, scoped, tag = 'scoped memory for tpu_custom_call.1']
    #allocation4 [shape = 's32[2]{0}', space=sflag, size = 0x8, scoped, tag = 'scoped memory for tpu_custom_call.1']
    #allocation5 [shape = 'u8[8192]{0}', space=vmem, size = 0x2000, scoped, tag = 'input window, operand 1']
    #allocation6 [shape = 's32[2]{0}', space=sflag, size = 0x8, scoped, tag = 'scoped memory for tpu_custom_call.1']
    #allocation7 [shape = 'u8[16384]{0}', space=vmem, size = 0x4000, scoped, tag = 'input window, operand 2, single buffered']
    #allocation8 [shape = 'u8[16384]{0}', space=vmem, size = 0x4000, scoped, tag = 'input window, operand 3, single buffered']
    #allocation9 [shape = 's32[1]{0}', space=sflag, size = 0x4, scoped, tag = 'scoped memory for tpu_custom_call.1']
    #allocation10 [shape = 'u8[16384]{0}', space=vmem, size = 0x4000, scoped, tag = 'input window, operand 5, single buffered']
    #allocation11 [shape = 'u8[8192]{0}', space=vmem, size = 0x2000, scoped, tag = 'output window, operand 0']
    %12 = vsyncpa [#allocation3], 0
    %s13 = scalar_lea.sflag [#allocation3], 1
    %14 = vsyncpa %s13, 0
    %15 = vsyncpa [#allocation6], 0
    %s16 = scalar_lea.sflag [#allocation6], 1
    %17 = vsyncpa %s16, 0
    %18 = vsyncpa [#allocation9], 0
    %19 = vsyncpa [#allocation4], 0
    %s20 = scalar_lea.sflag [#allocation4], 1
    %21 = vsyncpa %s20, 0
    loop: start=0, step=1, limit=4
    $region2: #{tpu_custom_call.1} parent=1 // loop_pre_header
      _
    $region3: #{tpu_custom_call.1} parent=1 // loop_header
      %s23 = sphi 0, %s27
      %p24 = scmp.ge.s32.totalorder %s23, 4
      %s33 = sphi 0, %s35
      %s36 = sphi 0, %s33
      %s37 = sphi 0, %s36
      %s53 = sphi 0, %s37
      %s59 = sphi 0, %s61
      %s62 = sphi 0, %s59
      %s63 = sphi 0, %s62
      %s79 = sphi 0, %s63
      %s83 = sphi 0, %s83
      %s85 = sphi 0, %s83
      %s86 = sphi 0, %s85
      %s100 = sphi 0, %s86
      %s104 = sphi 0, %s104
      %s106 = sphi 0, %s104
      %s107 = sphi 0, %s106
      %s121 = sphi 0, %s107
      %s125 = sphi 0, %s125
      %s127 = sphi 0, %s125
      %s128 = sphi 0, %s127
      %s142 = sphi 0, %s128
      %s146 = sphi 0, %s146
      %s148 = sphi 0, %s146
      %s149 = sphi 0, %s148
      %s163 = sphi 0, %s149
      %s167 = sphi 0, %s167
      %s169 = sphi 0, %s167
      %s170 = sphi 0, %s169
      %s184 = sphi 0, %s170
      %s190 = sphi 0, %s192
      %s193 = sphi 0, %s190
      %s194 = sphi 0, %s193
      %s210 = sphi 0, %s194
    $region4: #{tpu_custom_call.1} parent=1 // loop_header_branch
      %26 = sbr.rel (%p24) target = $region8
    $region5: #{tpu_custom_call.1} parent=1 // loop_body
      %s28 = ssub.s32 %s23, 1
      %s29 = ssub.s32 %s23, 2
      %s30 = sadd.s32 %s23, 1
      %s31 = ssub.s32 %s23, %s30
      %p32 = scmp.eq.s32.totalorder %s31, 0
      %s34 = sadd.s32 %s33, 1
      %s35 = scalar_select %p32, %s33, %s34
      %p38 = pneg %p32
      %p39 = scmp.eq.s32.totalorder %s23, 1
      %p40 = por %p38, %p39
      %p41 = scmp.ne.s32.totalorder %s33, %s36
      %p42 = scmp.eq.s32.totalorder %s23, 0
      %p43 = por %p41, %p42
      %p44 = scmp.ne.s32.totalorder %s33, %s36
      %p45 = scmp.eq.s32.totalorder %s28, 1
      %p46 = por %p44, %p45
      %p47 = scmp.ne.s32.totalorder %s36, %s37
      %p48 = scmp.eq.s32.totalorder %s28, 0
      %p49 = por %p47, %p48
      %p50 = scmp.ne.s32.totalorder %s36, %s37
      %p51 = scmp.eq.s32.totalorder %s29, 1
      %p52 = por %p50, %p51
      %p54 = scmp.ne.s32.totalorder %s37, %s53
      %p55 = scmp.eq.s32.totalorder %s29, 0
      %p56 = por %p54, %p55
      %s57 = ssub.s32 %s23, %s30
      %p58 = scmp.eq.s32.totalorder %s57, 0
      %s60 = sadd.s32 %s59, 1
      %s61 = scalar_select %p58, %s59, %s60
      %p64 = pneg %p58
      %p65 = scmp.eq.s32.totalorder %s23, 1
      %p66 = por %p64, %p65
      %p67 = scmp.ne.s32.totalorder %s59, %s62
      %p68 = scmp.eq.s32.totalorder %s23, 0
      %p69 = por %p67, %p68
      %p70 = scmp.ne.s32.totalorder %s59, %s62
      %p71 = scmp.eq.s32.totalorder %s28, 1
      %p72 = por %p70, %p71
      %p73 = scmp.ne.s32.totalorder %s62, %s63
      %p74 = scmp.eq.s32.totalorder %s28, 0
      %p75 = por %p73, %p74
      %p76 = scmp.ne.s32.totalorder %s62, %s63
      %p77 = scmp.eq.s32.totalorder %s29, 1
      %p78 = por %p76, %p77
      %p80 = scmp.ne.s32.totalorder %s63, %s79
      %p81 = scmp.eq.s32.totalorder %s29, 0
      %p82 = por %p80, %p81
      %s84 = sadd.s32 %s83, 1
      %p87 = scmp.eq.s32.totalorder %s23, 1
      %p88 = scmp.ne.s32.totalorder %s83, %s85
      %p89 = scmp.eq.s32.totalorder %s23, 0
      %p90 = por %p88, %p89
      %p91 = scmp.ne.s32.totalorder %s83, %s85
      %p92 = scmp.eq.s32.totalorder %s28, 1
      %p93 = por %p91, %p92
      %p94 = scmp.ne.s32.totalorder %s85, %s86
      %p95 = scmp.eq.s32.totalorder %s28, 0
      %p96 = por %p94, %p95
      %p97 = scmp.ne.s32.totalorder %s85, %s86
      %p98 = scmp.eq.s32.totalorder %s29, 1
      %p99 = por %p97, %p98
      %p101 = scmp.ne.s32.totalorder %s86, %s100
      %p102 = scmp.eq.s32.totalorder %s29, 0
      %p103 = por %p101, %p102
      %s105 = sadd.s32 %s104, 1
      %p108 = scmp.eq.s32.totalorder %s23, 1
      %p109 = scmp.ne.s32.totalorder %s104, %s106
      %p110 = scmp.eq.s32.totalorder %s23, 0
      %p111 = por %p109, %p110
      %p112 = scmp.ne.s32.totalorder %s104, %s106
      %p113 = scmp.eq.s32.totalorder %s28, 1
      %p114 = por %p112, %p113
      %p115 = scmp.ne.s32.totalorder %s106, %s107
      %p116 = scmp.eq.s32.totalorder %s28, 0
      %p117 = por %p115, %p116
      %p118 = scmp.ne.s32.totalorder %s106, %s107
      %p119 = scmp.eq.s32.totalorder %s29, 1
      %p120 = por %p118, %p119
      %p122 = scmp.ne.s32.totalorder %s107, %s121
      %p123 = scmp.eq.s32.totalorder %s29, 0
      %p124 = por %p122, %p123
      %s126 = sadd.s32 %s125, 1
      %p129 = scmp.eq.s32.totalorder %s23, 1
      %p130 = scmp.ne.s32.totalorder %s125, %s127
      %p131 = scmp.eq.s32.totalorder %s23, 0
      %p132 = por %p130, %p131
      %p133 = scmp.ne.s32.totalorder %s125, %s127
      %p134 = scmp.eq.s32.totalorder %s28, 1
      %p135 = por %p133, %p134
      %p136 = scmp.ne.s32.totalorder %s127, %s128
      %p137 = scmp.eq.s32.totalorder %s28, 0
      %p138 = por %p136, %p137
      %p139 = scmp.ne.s32.totalorder %s127, %s128
      %p140 = scmp.eq.s32.totalorder %s29, 1
      %p141 = por %p139, %p140
      %p143 = scmp.ne.s32.totalorder %s128, %s142
      %p144 = scmp.eq.s32.totalorder %s29, 0
      %p145 = por %p143, %p144
      %s147 = sadd.s32 %s146, 1
      %p150 = scmp.eq.s32.totalorder %s23, 1
      %p151 = scmp.ne.s32.totalorder %s146, %s148
      %p152 = scmp.eq.s32.totalorder %s23, 0
      %p153 = por %p151, %p152
      %p154 = scmp.ne.s32.totalorder %s146, %s148
      %p155 = scmp.eq.s32.totalorder %s28, 1
      %p156 = por %p154, %p155
      %p157 = scmp.ne.s32.totalorder %s148, %s149
      %p158 = scmp.eq.s32.totalorder %s28, 0
      %p159 = por %p157, %p158
      %p160 = scmp.ne.s32.totalorder %s148, %s149
      %p161 = scmp.eq.s32.totalorder %s29, 1
      %p162 = por %p160, %p161
      %p164 = scmp.ne.s32.totalorder %s149, %s163
      %p165 = scmp.eq.s32.totalorder %s29, 0
      %p166 = por %p164, %p165
      %s168 = sadd.s32 %s167, 1
      %p171 = scmp.eq.s32.totalorder %s23, 1
      %p172 = scmp.ne.s32.totalorder %s167, %s169
      %p173 = scmp.eq.s32.totalorder %s23, 0
      %p174 = por %p172, %p173
      %p175 = scmp.ne.s32.totalorder %s167, %s169
      %p176 = scmp.eq.s32.totalorder %s28, 1
      %p177 = por %p175, %p176
      %p178 = scmp.ne.s32.totalorder %s169, %s170
      %p179 = scmp.eq.s32.totalorder %s28, 0
      %p180 = por %p178, %p179
      %p181 = scmp.ne.s32.totalorder %s169, %s170
      %p182 = scmp.eq.s32.totalorder %s29, 1
      %p183 = por %p181, %p182
      %p185 = scmp.ne.s32.totalorder %s170, %s184
      %p186 = scmp.eq.s32.totalorder %s29, 0
      %p187 = por %p185, %p186
      %s188 = ssub.s32 %s23, %s30
      %p189 = scmp.eq.s32.totalorder %s188, 0
      %s191 = sadd.s32 %s190, 1
      %s192 = scalar_select %p189, %s190, %s191
      %p195 = pneg %p189
      %p196 = scmp.eq.s32.totalorder %s23, 1
      %p197 = por %p195, %p196
      %p198 = scmp.ne.s32.totalorder %s190, %s193
      %p199 = scmp.eq.s32.totalorder %s23, 0
      %p200 = por %p198, %p199
      %p201 = scmp.ne.s32.totalorder %s190, %s193
      %p202 = scmp.eq.s32.totalorder %s28, 1
      %p203 = por %p201, %p202
      %p204 = scmp.ne.s32.totalorder %s193, %s194
      %p205 = scmp.eq.s32.totalorder %s28, 0
      %p206 = por %p204, %p205
      %p207 = scmp.ne.s32.totalorder %s193, %s194
      %p208 = scmp.eq.s32.totalorder %s29, 1
      %p209 = por %p207, %p208
      %p211 = scmp.ne.s32.totalorder %s194, %s210
      %p212 = scmp.eq.s32.totalorder %s29, 0
      %p213 = por %p211, %p212
      %p214 = scmp.le.s32.totalorder 1, %s23
      %p215 = scmp.lt.s32.totalorder %s23, 3
      %p216 = pnand %p214, %p215
      %p217 = pneg %p216
      // Predicated region
      $region9: #{tpu_custom_call.1} parent=5 // pred_check
        _
      $region10: #{tpu_custom_call.1} parent=5 // pred_check_branch
        %219 = sbr.rel (%p216) target = $region12
      $region11: #{tpu_custom_call.1} parent=5 // pred_region
        %s220 = ssub.s32 %s23, 1
        // Predicated region
        $region13: #{tpu_custom_call.1} parent=11 // pred_check
          %p221 = pneg %p96
        $region14: #{tpu_custom_call.1} parent=11 // pred_check_branch
          %223 = sbr.rel (%p221) target = $region16
        $region15: #{tpu_custom_call.1} parent=11 // pred_region
          %s225 = ssub.s32 512, 512
          %226 = vsyncadd [#allocation6], %s225
          %s227 = sshll.u32 [#allocation7], 4
          %s228 = int_to_ptr.vmem [resolvable:$true] %s227
          %233 = dma.hbm_to_vmem [thread:$0]  %s2, 512, %s228, [#allocation6], 128, 128, 8
        $region16: #{tpu_custom_call.1} parent=11 // pred_fallthru
          _
        // Predicated region
        $region17: #{tpu_custom_call.1} parent=11 // pred_check
          %p234 = pneg %p117
        $region18: #{tpu_custom_call.1} parent=11 // pred_check_branch
          %236 = sbr.rel (%p234) target = $region20
        $region19: #{tpu_custom_call.1} parent=11 // pred_region
          %s238 = ssub.s32 512, 512
          %239 = vsyncadd [#allocation9], %s238
          %s240 = sshll.u32 [#allocation8], 4
          %s241 = int_to_ptr.vmem [resolvable:$true] %s240
          %246 = dma.hbm_to_vmem [thread:$0]  %s3, 512, %s241, [#allocation9], 128, 128, 8
        $region20: #{tpu_custom_call.1} parent=11 // pred_fallthru
          _
        // Predicated region
        $region21: #{tpu_custom_call.1} parent=11 // pred_check
          %p247 = pneg %p138
        $region22: #{tpu_custom_call.1} parent=11 // pred_check_branch
          %249 = sbr.rel (%p247) target = $region24
        $region23: #{tpu_custom_call.1} parent=11 // pred_region
          _
        $region24: #{tpu_custom_call.1} parent=11 // pred_fallthru
          _
        // Predicated region
        $region25: #{tpu_custom_call.1} parent=11 // pred_check
          %p250 = pneg %p159
        $region26: #{tpu_custom_call.1} parent=11 // pred_check_branch
          %252 = sbr.rel (%p250) target = $region28
        $region27: #{tpu_custom_call.1} parent=11 // pred_region
          %s254 = ssub.s32 512, 512
          %255 = vsyncadd [#allocation9], %s254
          %s256 = sshll.u32 [#allocation10], 4
          %s257 = int_to_ptr.vmem [resolvable:$true] %s256
          %262 = dma.hbm_to_vmem [thread:$0]  %s5, 512, %s257, [#allocation9], 128, 128, 8
        $region28: #{tpu_custom_call.1} parent=11 // pred_fallthru
          _
        // Predicated region
        $region29: #{tpu_custom_call.1} parent=11 // pred_check
          %p263 = pneg %p180
        $region30: #{tpu_custom_call.1} parent=11 // pred_check_branch
          %265 = sbr.rel (%p263) target = $region32
        $region31: #{tpu_custom_call.1} parent=11 // pred_region
          _
        $region32: #{tpu_custom_call.1} parent=11 // pred_fallthru
          _
      $region12: #{tpu_custom_call.1} parent=5 // pred_fallthru
        _
      %p266 = scmp.lt.s32.totalorder %s23, 2
      // Predicated region
      $region33: #{tpu_custom_call.1} parent=5 // pred_check
        %p267 = pneg %p266
      $region34: #{tpu_custom_call.1} parent=5 // pred_check_branch
        %269 = sbr.rel (%p267) target = $region36
      $region35: #{tpu_custom_call.1} parent=5 // pred_region
        // Predicated region
        $region37: #{tpu_custom_call.1} parent=35 // pred_check
          %p270 = pneg %p43
        $region38: #{tpu_custom_call.1} parent=35 // pred_check_branch
          %272 = sbr.rel (%p270) target = $region40
        $region39: #{tpu_custom_call.1} parent=35 // pred_region
          %s273 = sand.u32 %s33, 1
          %s274 = scalar_lea.sflag [#allocation3], %s273
          %s275 = sand.u32 %s33, 1
          %s276 = smul.addr %s275, 8
          %s277 = scalar_lea.vmem [#allocation2], %s276
          %s279 = ssub.s32 128, 128
          %280 = vsyncadd %s274, %s279
          %s281 = smul.addr %s23, 128
          %s282 = scalar_lea.hbm %s0, %s281
          %s284 = sshll.u32 %s277, 4
          %s285 = int_to_ptr.vmem [resolvable:$true] %s284
          %287 = dma.hbm_to_vmem [thread:$0]  %s282, 128, %s285, %s274
        $region40: #{tpu_custom_call.1} parent=35 // pred_fallthru
          _
        // Predicated region
        $region41: #{tpu_custom_call.1} parent=35 // pred_check
          %p288 = pneg %p69
        $region42: #{tpu_custom_call.1} parent=35 // pred_check_branch
          %290 = sbr.rel (%p288) target = $region44
        $region43: #{tpu_custom_call.1} parent=35 // pred_region
          %s291 = sand.u32 %s23, 1
          %s292 = scalar_lea.sflag [#allocation6], %s291
          %s293 = sand.u32 %s59, 1
          %s294 = smul.addr %s293, 8
          %s295 = scalar_lea.vmem [#allocation5], %s294
          %s297 = ssub.s32 128, 128
          %298 = vsyncadd %s292, %s297
          %s299 = smul.addr %s23, 128
          %s300 = scalar_lea.hbm %s1, %s299
          %s302 = sshll.u32 %s295, 4
          %s303 = int_to_ptr.vmem [resolvable:$true] %s302
          %305 = dma.hbm_to_vmem [thread:$0]  %s300, 128, %s303, %s292
        $region44: #{tpu_custom_call.1} parent=35 // pred_fallthru
          _
      $region36: #{tpu_custom_call.1} parent=5 // pred_fallthru
        _
      %p306 = scmp.le.s32.totalorder 1, %s23
      %p307 = scmp.lt.s32.totalorder %s23, 3
      %p308 = pnand %p306, %p307
      %p309 = pneg %p308
      // Predicated region
      $region45: #{tpu_custom_call.1} parent=5 // pred_check
        _
      $region46: #{tpu_custom_call.1} parent=5 // pred_check_branch
        %311 = sbr.rel (%p308) target = $region48
      $region47: #{tpu_custom_call.1} parent=5 // pred_region
        %s312 = ssub.s32 %s23, 1
        %s313 = sand.u32 %s36, 1
        %s314 = scalar_lea.sflag [#allocation3], %s313
        %s315 = sand.u32 %s36, 1
        %s316 = smul.addr %s315, 8
        %s317 = scalar_lea.vmem [#allocation2], %s316
        // Predicated region
        $region49: #{tpu_custom_call.1} parent=47 // pred_check
          %p318 = pneg %p49
        $region50: #{tpu_custom_call.1} parent=47 // pred_check_branch
          %320 = sbr.rel (%p318) target = $region52
        $region51: #{tpu_custom_call.1} parent=47 // pred_region
          %321 = dma.done %s314, 128
        $region52: #{tpu_custom_call.1} parent=47 // pred_fallthru
          _
        %s322 = sand.u32 %s28, 1
        %s323 = scalar_lea.sflag [#allocation6], %s322
        %s324 = sand.u32 %s62, 1
        %s325 = smul.addr %s324, 8
        %s326 = scalar_lea.vmem [#allocation5], %s325
        // Predicated region
        $region53: #{tpu_custom_call.1} parent=47 // pred_check
          %p327 = pneg %p75
        $region54: #{tpu_custom_call.1} parent=47 // pred_check_branch
          %329 = sbr.rel (%p327) target = $region56
        $region55: #{tpu_custom_call.1} parent=47 // pred_region
          %330 = dma.done %s323, 128
        $region56: #{tpu_custom_call.1} parent=47 // pred_fallthru
          _
        // Predicated region
        $region57: #{tpu_custom_call.1} parent=47 // pred_check
          %p331 = pneg %p96
        $region58: #{tpu_custom_call.1} parent=47 // pred_check_branch
          %333 = sbr.rel (%p331) target = $region60
        $region59: #{tpu_custom_call.1} parent=47 // pred_region
          %334 = dma.done [#allocation6], 512
        $region60: #{tpu_custom_call.1} parent=47 // pred_fallthru
          _
        // Predicated region
        $region61: #{tpu_custom_call.1} parent=47 // pred_check
          %p335 = pneg %p117
        $region62: #{tpu_custom_call.1} parent=47 // pred_check_branch
          %337 = sbr.rel (%p335) target = $region64
        $region63: #{tpu_custom_call.1} parent=47 // pred_region
          %338 = dma.done [#allocation9], 512
        $region64: #{tpu_custom_call.1} parent=47 // pred_fallthru
          _
        // Predicated region
        $region65: #{tpu_custom_call.1} parent=47 // pred_check
          %p339 = pneg %p159
        $region66: #{tpu_custom_call.1} parent=47 // pred_check_branch
          %341 = sbr.rel (%p339) target = $region68
        $region67: #{tpu_custom_call.1} parent=47 // pred_region
          %342 = dma.done [#allocation9], 512
        $region68: #{tpu_custom_call.1} parent=47 // pred_fallthru
          _
        %s343 = sand.u32 %s36, 1
        %s344 = scalar_lea.sflag [#allocation3], %s343
        %s345 = sand.u32 %s36, 1
        %s346 = smul.addr %s345, 8
        %s347 = scalar_lea.vmem [#allocation2], %s346
        %p348 = pneg %p49
        %p349 = pneg %p46
        %s350 = sand.u32 %s28, 1
        %s351 = scalar_lea.sflag [#allocation6], %s350
        %s352 = sand.u32 %s62, 1
        %s353 = smul.addr %s352, 8
        %s354 = scalar_lea.vmem [#allocation5], %s353
        %p355 = pneg %p75
        %p356 = pneg %p72
        %p357 = pneg %p96
        %p358 = pneg %p93
        %p359 = pneg %p117
        %p360 = pneg %p114
        %p361 = pneg %p138
        %p362 = pneg %p135
        %p363 = pneg %p159
        %p364 = pneg %p156
        %p365 = pneg %p180
        %p366 = pneg %p177
        %p367 = pneg %p206
        %p368 = pneg %p203
        %s369 = sand.u32 %s193, 1
        %s370 = scalar_lea.sflag [#allocation4], %s369
        %s371 = sand.u32 %s193, 1
        %s372 = smul.addr %s371, 8
        %s373 = scalar_lea.vmem [#allocation11], %s372
        %v374 = vld [vmem:[%s317] sm:$0xff]
        %v375 = vld [vmem:[#allocation7] sm:$0xff]
        %v376 = vld [vmem:[#allocation7 + $0x8] sm:$0xff]
        %v377 = vld [vmem:[#allocation7 + $0x10] sm:$0xff]
        %v378 = vld [vmem:[#allocation7 + $0x18] sm:$0xff]
        %v379 = vld [vmem:[%s326] sm:$0xff]
        %v380 = vld [vmem:[#allocation8] sm:$0xff]
        %v381 = vld [vmem:[#allocation8 + $0x8] sm:$0xff]
        %v382 = vld [vmem:[#allocation8 + $0x10] sm:$0xff]
        %v383 = vld [vmem:[#allocation8 + $0x18] sm:$0xff]
        %vm384 = vcmask 261120
        %v386 = vsel %vm384, %v379, 0
        %388 = vmatprep.subr.mxu0 0.0
        %389 = vmatpush1.msra.mxu0 %v380
        %390 = vmatprep.subr.mxu0 0.0
        %391 = vmatpush1.msra.mxu0 %v381
        %392 = vmatprep.subr.mxu0 0.0
        %393 = vmatpush1.msra.mxu0 %v382
        %394 = vmatprep.subr.mxu0 0.0
        %395 = vmatpush1.msra.mxu0 %v383
        %396 = vmatprep.subr.mxu0 0.0
        %397 = vmatpush1.msra.mxu0 0.0
        %398 = vmatprep.subr.mxu0 0.0
        %399 = vmatpush1.msra.mxu0 0.0
        %400 = vmatprep.subr.mxu0 0.0
        %401 = vmatpush1.msra.mxu0 0.0
        %402 = vmatprep.subr.mxu0 0.0
        %403 = vmatpush1.msra.mxu0 0.0
        %404 = vmatprep.subr.mxu0 0.0
        %405 = vmatpush1.msra.mxu0 0.0
        %406 = vmatprep.subr.mxu0 0.0
        %407 = vmatpush1.msra.mxu0 0.0
        %408 = vmatprep.subr.mxu0 0.0
        %409 = vmatpush1.msra.mxu0 0.0
        %410 = vmatprep.subr.mxu0 0.0
        %411 = vmatpush1.msra.mxu0 0.0
        %412 = vmatprep.subr.mxu0 0.0
        %413 = vmatpush1.msra.mxu0 0.0
        %414 = vmatprep.subr.mxu0 0.0
        %415 = vmatpush1.msra.mxu0 0.0
        %416 = vmatprep.subr.mxu0 0.0
        %417 = vmatpush1.msra.mxu0 0.0
        %418 = vmatprep.subr.mxu0 0.0
        %419 = vmatpush1.msra.mxu0 0.0
        %420 = vmatprep.subr.mxu0 0.0
        %421 = vmatpush1.msra.mxu0 0.0
        %422 = vmatprep.subr.mxu0 0.0
        %423 = vmatpush1.msra.mxu0 0.0
        %424 = vmatprep.subr.mxu0 0.0
        %425 = vmatpush1.msra.mxu0 0.0
        %426 = vmatprep.subr.mxu0 0.0
        %427 = vmatpush1.msra.mxu0 0.0
        %428 = vmatprep.subr.mxu0 0.0
        %429 = vmatpush1.msra.mxu0 0.0
        %430 = vmatprep.subr.mxu0 0.0
        %431 = vmatpush1.msra.mxu0 0.0
        %432 = vmatprep.subr.mxu0 0.0
        %433 = vmatpush1.msra.mxu0 0.0
        %434 = vmatprep.subr.mxu0 0.0
        %435 = vmatpush1.msra.mxu0 0.0
        %436 = vmatprep.subr.mxu0 0.0
        %437 = vmatpush1.msra.mxu0 0.0
        %438 = vmatprep.subr.mxu0 0.0
        %439 = vmatpush1.msra.mxu0 0.0
        %440 = vmatprep.subr.mxu0 0.0
        %441 = vmatpush1.msra.mxu0 0.0
        %442 = vmatprep.subr.mxu0 0.0
        %443 = vmatpush1.msra.mxu0 0.0
        %444 = vmatprep.subr.mxu0 0.0
        %445 = vmatpush1.msra.mxu0 0.0
        %446 = vmatprep.subr.mxu0 0.0
        %447 = vmatpush1.msra.mxu0 0.0
        %448 = vmatprep.subr.mxu0 0.0
        %449 = vmatpush1.msra.mxu0 0.0
        %450 = vmatprep.subr.mxu0 0.0
        %451 = vmatpush1.msra.mxu0 0.0
        %452 = vmatprep.mubr.f32.mxu0 0.0
        %453 = vmatmul.mubr.f32.gmra.mrb[0].mxu0 %v386
        %v454 = vpop.f32.mrb[0].mxu0
        %v455 = vadd.f32 0.0, %v454
        %v456 = vpop.f32.mrb[0].mxu0
        %457 = vdwg.mxu0
        %v459 = vsel %vm384, %v374, 0
        %461 = vmatprep.subr.mxu0 0.0
        %462 = vmatpush1.msra.mxu0 %v375
        %463 = vmatprep.subr.mxu0 0.0
        %464 = vmatpush1.msra.mxu0 %v376
        %465 = vmatprep.subr.mxu0 0.0
        %466 = vmatpush1.msra.mxu0 %v377
        %467 = vmatprep.subr.mxu0 0.0
        %468 = vmatpush1.msra.mxu0 %v378
        %469 = vmatprep.subr.mxu0 0.0
        %470 = vmatpush1.msra.mxu0 0.0
        %471 = vmatprep.subr.mxu0 0.0
        %472 = vmatpush1.msra.mxu0 0.0
        %473 = vmatprep.subr.mxu0 0.0
        %474 = vmatpush1.msra.mxu0 0.0
        %475 = vmatprep.subr.mxu0 0.0
        %476 = vmatpush1.msra.mxu0 0.0
        %477 = vmatprep.subr.mxu0 0.0
        %478 = vmatpush1.msra.mxu0 0.0
        %479 = vmatprep.subr.mxu0 0.0
        %480 = vmatpush1.msra.mxu0 0.0
        %481 = vmatprep.subr.mxu0 0.0
        %482 = vmatpush1.msra.mxu0 0.0
        %483 = vmatprep.subr.mxu0 0.0
        %484 = vmatpush1.msra.mxu0 0.0
        %485 = vmatprep.subr.mxu0 0.0
        %486 = vmatpush1.msra.mxu0 0.0
        %487 = vmatprep.subr.mxu0 0.0
        %488 = vmatpush1.msra.mxu0 0.0
        %489 = vmatprep.subr.mxu0 0.0
        %490 = vmatpush1.msra.mxu0 0.0
        %491 = vmatprep.subr.mxu0 0.0
        %492 = vmatpush1.msra.mxu0 0.0
        %493 = vmatprep.subr.mxu0 0.0
        %494 = vmatpush1.msra.mxu0 0.0
        %495 = vmatprep.subr.mxu0 0.0
        %496 = vmatpush1.msra.mxu0 0.0
        %497 = vmatprep.subr.mxu0 0.0
        %498 = vmatpush1.msra.mxu0 0.0
        %499 = vmatprep.subr.mxu0 0.0
        %500 = vmatpush1.msra.mxu0 0.0
        %501 = vmatprep.subr.mxu0 0.0
        %502 = vmatpush1.msra.mxu0 0.0
        %503 = vmatprep.subr.mxu0 0.0
        %504 = vmatpush1.msra.mxu0 0.0
        %505 = vmatprep.subr.mxu0 0.0
        %506 = vmatpush1.msra.mxu0 0.0
        %507 = vmatprep.subr.mxu0 0.0
        %508 = vmatpush1.msra.mxu0 0.0
        %509 = vmatprep.subr.mxu0 0.0
        %510 = vmatpush1.msra.mxu0 0.0
        %511 = vmatprep.subr.mxu0 0.0
        %512 = vmatpush1.msra.mxu0 0.0
        %513 = vmatprep.subr.mxu0 0.0
        %514 = vmatpush1.msra.mxu0 0.0
        %515 = vmatprep.subr.mxu0 0.0
        %516 = vmatpush1.msra.mxu0 0.0
        %517 = vmatprep.subr.mxu0 0.0
        %518 = vmatpush1.msra.mxu0 0.0
        %519 = vmatprep.subr.mxu0 0.0
        %520 = vmatpush1.msra.mxu0 0.0
        %521 = vmatprep.subr.mxu0 0.0
        %522 = vmatpush1.msra.mxu0 0.0
        %523 = vmatprep.subr.mxu0 0.0
        %524 = vmatpush1.msra.mxu0 0.0
        %525 = vmatprep.mubr.f32.mxu0 0.0
        %526 = vmatmul.mubr.f32.gmra.mrb[0].mxu0 %v459
        %v527 = vpop.f32.mrb[0].mxu0
        %v528 = vadd.f32 %v455, %v527
        %v529 = vpop.f32.mrb[0].mxu0
        %530 = vdwg.mxu0
        %v531 = vld [vmem:[%s4] sm:$0x1]
        %v533 = vlaneseq
        %v534 = vshrl.u32 %v533, 7
        %v535 = vsub.s32 0, %v534
        %v536 = vrot.slane %v531, %v535
        %v538 = vadd.f32 %v528, %v536
        %vm539 = vcmp.ge.f32.partialorder %v538, 0.0
        %v540 = vmul.f32 %v538, 0.2
        %v541 = vsel %vm539, %v538, %v540
        %v542 = vld [vmem:[#allocation10] sm:$0xff]
        %v543 = vld [vmem:[#allocation10 + $0x8] sm:$0xff]
        %v544 = vld [vmem:[#allocation10 + $0x10] sm:$0xff]
        %v545 = vld [vmem:[#allocation10 + $0x18] sm:$0xff]
        %v546 = vld [vmem:[%s6] sm:$0x1]
        %v548 = vlaneseq
        %v549 = vshrl.u32 %v548, 7
        %v550 = vsub.s32 0, %v549
        %v551 = vrot.slane %v546, %v550
        %v554 = vsel %vm384, %v541, 0
        %556 = vmatprep.subr.mxu0 0.0
        %557 = vmatpush1.msra.mxu0 %v542
        %558 = vmatprep.subr.mxu0 0.0
        %559 = vmatpush1.msra.mxu0 %v543
        %560 = vmatprep.subr.mxu0 0.0
        %561 = vmatpush1.msra.mxu0 %v544
        %562 = vmatprep.subr.mxu0 0.0
        %563 = vmatpush1.msra.mxu0 %v545
        %564 = vmatprep.subr.mxu0 0.0
        %565 = vmatpush1.msra.mxu0 0.0
        %566 = vmatprep.subr.mxu0 0.0
        %567 = vmatpush1.msra.mxu0 0.0
        %568 = vmatprep.subr.mxu0 0.0
        %569 = vmatpush1.msra.mxu0 0.0
        %570 = vmatprep.subr.mxu0 0.0
        %571 = vmatpush1.msra.mxu0 0.0
        %572 = vmatprep.subr.mxu0 0.0
        %573 = vmatpush1.msra.mxu0 0.0
        %574 = vmatprep.subr.mxu0 0.0
        %575 = vmatpush1.msra.mxu0 0.0
        %576 = vmatprep.subr.mxu0 0.0
        %577 = vmatpush1.msra.mxu0 0.0
        %578 = vmatprep.subr.mxu0 0.0
        %579 = vmatpush1.msra.mxu0 0.0
        %580 = vmatprep.subr.mxu0 0.0
        %581 = vmatpush1.msra.mxu0 0.0
        %582 = vmatprep.subr.mxu0 0.0
        %583 = vmatpush1.msra.mxu0 0.0
        %584 = vmatprep.subr.mxu0 0.0
        %585 = vmatpush1.msra.mxu0 0.0
        %586 = vmatprep.subr.mxu0 0.0
        %587 = vmatpush1.msra.mxu0 0.0
        %588 = vmatprep.subr.mxu0 0.0
        %589 = vmatpush1.msra.mxu0 0.0
        %590 = vmatprep.subr.mxu0 0.0
        %591 = vmatpush1.msra.mxu0 0.0
        %592 = vmatprep.subr.mxu0 0.0
        %593 = vmatpush1.msra.mxu0 0.0
        %594 = vmatprep.subr.mxu0 0.0
        %595 = vmatpush1.msra.mxu0 0.0
        %596 = vmatprep.subr.mxu0 0.0
        %597 = vmatpush1.msra.mxu0 0.0
        %598 = vmatprep.subr.mxu0 0.0
        %599 = vmatpush1.msra.mxu0 0.0
        %600 = vmatprep.subr.mxu0 0.0
        %601 = vmatpush1.msra.mxu0 0.0
        %602 = vmatprep.subr.mxu0 0.0
        %603 = vmatpush1.msra.mxu0 0.0
        %604 = vmatprep.subr.mxu0 0.0
        %605 = vmatpush1.msra.mxu0 0.0
        %606 = vmatprep.subr.mxu0 0.0
        %607 = vmatpush1.msra.mxu0 0.0
        %608 = vmatprep.subr.mxu0 0.0
        %609 = vmatpush1.msra.mxu0 0.0
        %610 = vmatprep.subr.mxu0 0.0
        %611 = vmatpush1.msra.mxu0 0.0
        %612 = vmatprep.subr.mxu0 0.0
        %613 = vmatpush1.msra.mxu0 0.0
        %614 = vmatprep.subr.mxu0 0.0
        %615 = vmatpush1.msra.mxu0 0.0
        %616 = vmatprep.subr.mxu0 0.0
        %617 = vmatpush1.msra.mxu0 0.0
        %618 = vmatprep.subr.mxu0 0.0
        %619 = vmatpush1.msra.mxu0 0.0
        %620 = vmatprep.mubr.f32.mxu0 0.0
        %621 = vmatmul.mubr.f32.gmra.mrb[0].mxu0 %v554
        %v622 = vpop.f32.mrb[0].mxu0
        %v623 = vadd.f32 %v551, %v622
        %v624 = vpop.f32.mrb[0].mxu0
        %625 = vdwg.mxu0
        %626 = vst.msk [vmem:[%s373] sm:$0xff] %vm384, %v623
        %s627 = sand.u32 %s193, 1
        %s628 = scalar_lea.sflag [#allocation4], %s627
        %s629 = sand.u32 %s193, 1
        %s630 = smul.addr %s629, 8
        %s631 = scalar_lea.vmem [#allocation11], %s630
        // Predicated region
        $region69: #{tpu_custom_call.1} parent=47 // pred_check
          %p632 = pneg %p203
        $region70: #{tpu_custom_call.1} parent=47 // pred_check_branch
          %634 = sbr.rel (%p632) target = $region72
        $region71: #{tpu_custom_call.1} parent=47 // pred_region
          %s636 = ssub.s32 128, 128
          %637 = vsyncadd %s628, %s636
          %s638 = smul.addr %s28, 128
          %s639 = scalar_lea.hbm %s7, %s638
          %s641 = sshll.u32 %s631, 4
          %s642 = int_to_ptr.vmem [resolvable:$true] %s641
          %644 = dma.vmem_to_hbm [thread:$0]  %s642, 128, %s639, %s628
        $region72: #{tpu_custom_call.1} parent=47 // pred_fallthru
          _
      $region48: #{tpu_custom_call.1} parent=5 // pred_fallthru
        _
      %p645 = scmp.le.s32.totalorder 2, %s23
      // Predicated region
      $region73: #{tpu_custom_call.1} parent=5 // pred_check
        %p646 = pneg %p645
      $region74: #{tpu_custom_call.1} parent=5 // pred_check_branch
        %648 = sbr.rel (%p646) target = $region76
      $region75: #{tpu_custom_call.1} parent=5 // pred_region
        %s649 = ssub.s32 %s23, 2
        // Predicated region
        $region77: #{tpu_custom_call.1} parent=75 // pred_check
          %p650 = pneg %p209
        $region78: #{tpu_custom_call.1} parent=75 // pred_check_branch
          %652 = sbr.rel (%p650) target = $region80
        $region79: #{tpu_custom_call.1} parent=75 // pred_region
          %s653 = sand.u32 %s194, 1
          %s654 = scalar_lea.sflag [#allocation4], %s653
          %s655 = sand.u32 %s194, 1
          %s656 = smul.addr %s655, 8
          %s657 = scalar_lea.vmem [#allocation11], %s656
          %658 = dma.done %s654, 128
        $region80: #{tpu_custom_call.1} parent=75 // pred_fallthru
          _
      $region76: #{tpu_custom_call.1} parent=5 // pred_fallthru
        _
    $region6: #{tpu_custom_call.1} parent=1 // loop_footer
      %s27 = sadd.s32 1, %s23
    $region7: #{tpu_custom_call.1} parent=1 // loop_footer_branch
      %22 = sbr.rel target = $region3
    $region8: #{tpu_custom_call.1} parent=1 // loop_exit
      _
    %659 = vsyncpa [#allocation3], 1
    %s660 = scalar_lea.sflag [#allocation3], 1
    %661 = vsyncpa %s660, 1
    %662 = vsyncpa [#allocation6], 1
    %s663 = scalar_lea.sflag [#allocation6], 1
    %664 = vsyncpa %s663, 1
    %665 = vsyncpa [#allocation9], 1
    %666 = vsyncpa [#allocation4], 1
    %s667 = scalar_lea.sflag [#allocation4], 1
    %668 = vsyncpa %s667, 1

</llo_original>
